<compile_context>
chip_gen: v7x
topology: tpu7x:2x2x1
jax: 0.10.0
libtpu: 0.0.40
codegen_flags: <defaults>
</compile_context>

<pallas_src>
import math

import jax
import jax.numpy as jnp
from jax.experimental import pallas as pl
from jax.experimental.pallas import tpu as pltpu

LANE = 128       # vreg lane width
SUBLANE = 8      # f32 sublane count


def _round_up(n, m):
    return ((n + m - 1) // m) * m


# ---------------------------------------------------------------------------
# Kernels
# ---------------------------------------------------------------------------
def _linear_kernel(x_ref, w_ref, b_ref, o_ref):
    # o = x @ W + b     (x: [tm, F], W: [F, C_pad], b: [1, C_pad])
    acc = jnp.dot(x_ref[...], w_ref[...], preferred_element_type=jnp.float32)
    o_ref[...] = (acc + b_ref[...]).astype(o_ref.dtype)


def _mlp2_kernel(x_ref, w1_ref, b1_ref, w2_ref, b2_ref, o_ref):
    # h = relu(x @ W1 + b1); o = h @ W2 + b2      (epilogue math in f32)
    h = jnp.dot(x_ref[...], w1_ref[...], preferred_element_type=jnp.float32)
    h = jnp.maximum(h + b1_ref[...], 0.0)
    acc = jnp.dot(h.astype(w2_ref.dtype), w2_ref[...],
                  preferred_element_type=jnp.float32)
    o_ref[...] = (acc + b2_ref[...]).astype(o_ref.dtype)


# ---------------------------------------------------------------------------
# Wrappers: batch-tiled grid, resident weights, lane-padded outputs
# ---------------------------------------------------------------------------
def _pad_batch(x, tm):
    b = x.shape[0]
    b_pad = _round_up(b, tm)
    if b_pad != b:
        x = jnp.pad(x, ((0, b_pad - b), (0, 0)))
    return x, b_pad


def _batch_tile(b, block_b):
    # tile is a multiple of 8 sublanes; sized so double-buffered x/out tiles
    # (+ resident weights) fit the smallest (v7x, 64 MiB) VMEM comfortably.
    return min(block_b, _round_up(b, SUBLANE))


def linear_forward(x, w_p, b_p, num_classes, *, block_b=512):
    """x: (B, F); w_p: (F, C_pad) pre-transposed/padded; b_p: (1, C_pad) f32."""
    b, f = x.shape
    c_pad = w_p.shape[1]
    tm = _batch_tile(b, block_b)
    x_p, b_pad = _pad_batch(x, tm)

    out = pl.pallas_call(
        _linear_kernel,
        out_shape=jax.ShapeDtypeStruct((b_pad, c_pad), x.dtype),
        grid=(b_pad // tm,),
        in_specs=[
            pl.BlockSpec((tm, f), lambda i: (i, 0)),        # streamed x tiles
            pl.BlockSpec((f, c_pad), lambda i: (0, 0)),     # resident W
            pl.BlockSpec((1, c_pad), lambda i: (0, 0)),     # resident b
        ],
        out_specs=pl.BlockSpec((tm, c_pad), lambda i: (i, 0)),
        compiler_params=pltpu.CompilerParams(
            dimension_semantics=("parallel",)),
    )(x_p, w_p, b_p)
    return out[:b, :num_classes]


def mlp2_forward(x, w1_p, b1_p, w2_p, b2_p, num_classes, *, block_b=512):
    """Two-layer head: Linear(F, H_pad) -> ReLU -> Linear(H_pad, C_pad)."""
    b, f = x.shape
    h_pad = w1_p.shape[1]
    c_pad = w2_p.shape[1]
    tm = _batch_tile(b, block_b)
    x_p, b_pad = _pad_batch(x, tm)

    out = pl.pallas_call(
        _mlp2_kernel,
        out_shape=jax.ShapeDtypeStruct((b_pad, c_pad), x.dtype),
        grid=(b_pad // tm,),
        in_specs=[
            pl.BlockSpec((tm, f), lambda i: (i, 0)),        # streamed x tiles
            pl.BlockSpec((f, h_pad), lambda i: (0, 0)),     # resident W1
            pl.BlockSpec((1, h_pad), lambda i: (0, 0)),     # resident b1
            pl.BlockSpec((h_pad, c_pad), lambda i: (0, 0)), # resident W2
            pl.BlockSpec((1, c_pad), lambda i: (0, 0)),     # resident b2
        ],
        out_specs=pl.BlockSpec((tm, c_pad), lambda i: (i, 0)),
        compiler_params=pltpu.CompilerParams(
            dimension_semantics=("parallel",)),
    )(x_p, w1_p, b1_p, w2_p, b2_p)
    return out[:b, :num_classes]


# ---------------------------------------------------------------------------
# Module-equivalent. PyTorch Linear default init:
# uniform(-1/sqrt(fan_in), 1/sqrt(fan_in)) for both weight and bias.
# Weights are transposed to (in, out) and zero-padded to lane multiples ONCE.
# ---------------------------------------------------------------------------
class LinearClassifier:
    def __init__(self, key, num_classes=10, two_layers=False, feat_dim=128,
                 dtype=jnp.float32, compute_dtype=None):
        self.two_layers = two_layers
        self.num_classes = num_classes
        self.dtype = dtype
        # set compute_dtype=jnp.bfloat16 on v6e/v7x for 2x MXU rate & half the
        # x/W traffic (accumulation stays f32 inside the kernel).
        self.compute_dtype = dtype if compute_dtype is None else compute_dtype

        def init_linear(k, fan_in, fan_out):
            kw, kb = jax.random.split(k)
            bound = 1.0 / math.sqrt(fan_in)
            w = jax.random.uniform(kw, (fan_out, fan_in), dtype,
                                   minval=-bound, maxval=bound)
            b = jax.random.uniform(kb, (fan_out,), dtype,
                                   minval=-bound, maxval=bound)
            return w, b

        def pack(w, b, in_pad, out_pad):
            # (out, in) PyTorch layout -> (in_pad, out_pad) MXU layout,
            # zero-padded so padded lanes/rows contribute nothing.
            fan_out, fan_in = w.shape
            w_p = jnp.zeros((in_pad, out_pad), self.compute_dtype)
            w_p = w_p.at[:fan_in, :fan_out].set(
                jnp.transpose(w).astype(self.compute_dtype))
            b_p = jnp.zeros((1, out_pad), jnp.float32)
            b_p = b_p.at[0, :fan_out].set(b.astype(jnp.float32))
            return w_p, b_p

        c_pad = _round_up(num_classes, LANE)
        if two_layers:
            k1, k2 = jax.random.split(key)
            self.w1, self.b1 = init_linear(k1, feat_dim, feat_dim)
            self.w2, self.b2 = init_linear(k2, feat_dim, num_classes)
            h_pad = _round_up(feat_dim, LANE)
            self.w1_p, self.b1_p = pack(self.w1, self.b1, feat_dim, h_pad)
            self.w2_p, self.b2_p = pack(self.w2, self.b2, h_pad, c_pad)
        else:
            self.w, self.b = init_linear(key, feat_dim, num_classes)
            self.w_p, self.b_p = pack(self.w, self.b, feat_dim, c_pad)

    def __call__(self, features):
        x = features.astype(self.compute_dtype)
        if self.two_layers:
            out = mlp2_forward(x, self.w1_p, self.b1_p, self.w2_p, self.b2_p,
                               self.num_classes)
        else:
            out = linear_forward(x, self.w_p, self.b_p, self.num_classes)
        return out.astype(self.dtype)


# ---------------------------------------------------------------------------
if __name__ == "__main__":
    key = jax.random.PRNGKey(0)
    k_param, k_x, k_param2 = jax.random.split(key, 3)

    batch, feat_dim, num_classes = 2, 128, 10
    x = jax.random.normal(k_x, (batch, feat_dim), jnp.float32)

    # Default configuration: single Linear(feat_dim, num_classes)
    clf = LinearClassifier(k_param, num_classes=num_classes,
                           two_layers=False, feat_dim=feat_dim)
    out = jax.block_until_ready(clf(x))
    assert out.shape == (batch, num_classes)
    ref = x @ clf.w.T + clf.b
    assert jnp.allclose(out, ref, atol=1e-5), "single-layer mismatch"

    # Also exercise the two_layers=True path
    clf2 = LinearClassifier(k_param2, num_classes=num_classes,
                            two_layers=True, feat_dim=feat_dim)
    out2 = jax.block_until_ready(clf2(x))
    ref2 = jnp.maximum(x @ clf2.w1.T + clf2.b1, 0.0) @ clf2.w2.T + clf2.b2
    assert out2.shape == (batch, num_classes)
    assert jnp.allclose(out2, ref2, atol=1e-4), "two-layer mismatch"

    print("KERNEL_OK")
</pallas_src>

<mosaic_0001>
module attributes {stable_mosaic.version = 11 : i64} {
  func.func @_linear_kernel(%arg0: i32, %arg1: memref<8x128xf32, #tpu.memory_space<vmem>>, %arg2: memref<128x128xf32, #tpu.memory_space<vmem>>, %arg3: memref<1x128xf32, #tpu.memory_space<vmem>>, %arg4: memref<8x128xf32, #tpu.memory_space<vmem>>) attributes {dimension_semantics = [#tpu.dimension_semantics<parallel>], iteration_bounds = array<i64: 1>, scalar_prefetch = 0 : i64, scratch_operands = 0 : i64, tpu.core_type = #tpu.core_type<tc>, window_params = [{transform_indices = @transform_0, window_bounds = array<i64: 8, 128>}, {pipeline_mode = #tpu.pipeline_mode<synchronous>, transform_indices = @transform_1, window_bounds = array<i64: 128, 128>}, {pipeline_mode = #tpu.pipeline_mode<synchronous>, transform_indices = @transform_2, window_bounds = array<i64: 1, 128>}, {transform_indices = @transform_3, window_bounds = array<i64: 8, 128>}]} {
    %c0 = arith.constant 0 : index
    %c0_0 = arith.constant 0 : index
    %0 = vector.load %arg1[%c0, %c0_0] : memref<8x128xf32, #tpu.memory_space<vmem>>, vector<8x128xf32>
    %c0_1 = arith.constant 0 : index
    %c0_2 = arith.constant 0 : index
    %1 = vector.load %arg2[%c0_1, %c0_2] : memref<128x128xf32, #tpu.memory_space<vmem>>, vector<128x128xf32>
    %cst = arith.constant dense<0.000000e+00> : vector<8x128xf32>
    %2 = tpu.matmul %0, %1, %cst {dimension_numbers = #tpu.dot_dimension_numbers<[1], [0], [0], [1], [0, 0, 1, 1], [], []>} : vector<8x128xf32>, vector<128x128xf32>, vector<8x128xf32> -> vector<8x128xf32>
    %c0_3 = arith.constant 0 : index
    %c0_4 = arith.constant 0 : index
    %3 = vector.load %arg3[%c0_3, %c0_4] : memref<1x128xf32, #tpu.memory_space<vmem>>, vector<1x128xf32>
    %4 = vector.broadcast %3 : vector<1x128xf32> to vector<8x128xf32>
    %5 = arith.addf %2, %4 : vector<8x128xf32>
    %c0_5 = arith.constant 0 : index
    %c0_6 = arith.constant 0 : index
    %6 = vector.load %arg4[%c0_5, %c0_6] : memref<8x128xf32, #tpu.memory_space<vmem>>, vector<8x128xf32>
    tpu.vector_store %arg4[%c0_5, %c0_6], %5 {strides = array<i32>} : memref<8x128xf32, #tpu.memory_space<vmem>>, vector<8x128xf32>,
    return
  }
  func.func @transform_0(%arg0: i32) -> (i32, i32) {
    %c0_i32 = arith.constant 0 : i32
    %c0_i32_0 = arith.constant 0 : i32
    return %arg0, %c0_i32 : i32, i32
  }
  func.func @transform_1(%arg0: i32) -> (i32, i32) {
    %c0_i32 = arith.constant 0 : i32
    %c0_i32_0 = arith.constant 0 : i32
    %c0_i32_1 = arith.constant 0 : i32
    return %c0_i32, %c0_i32_0 : i32, i32
  }
  func.func @transform_2(%arg0: i32) -> (i32, i32) {
    %c0_i32 = arith.constant 0 : i32
    %c0_i32_0 = arith.constant 0 : i32
    %c0_i32_1 = arith.constant 0 : i32
    return %c0_i32, %c0_i32_0 : i32, i32
  }
  func.func @transform_3(%arg0: i32) -> (i32, i32) {
    %c0_i32 = arith.constant 0 : i32
    %c0_i32_0 = arith.constant 0 : i32
    return %arg0, %c0_i32 : i32, i32
  }
}

</mosaic_0001>

<llo_original>
// kernel: tpu_custom_call.1
$region0: #{tpu_custom_call.1}
  #allocation0 [shape = 'u32[]', space=smem, size = 0x4, offset = 0x4, fixed_abs, tag = 'smem constant byte address 0x4 - core index']
  #allocation1 [shape = 'u32[144,128]{1,0:T(1,128)}', space=vmem, size = 0x12000, scoped, tag = 'internal scratch']
  %s0 = inlined_call_operand.hbm [shape: f32[8,128], index: 0, kind: input, shape index: {}]
  %s1 = inlined_call_operand.hbm [shape: f32[128,128], index: 1, kind: input, shape index: {}]
  %s2 = inlined_call_operand.vmem [shape: f32[1,128], index: 2, kind: input, shape index: {}]
  %s3 = inlined_call_operand.hbm [shape: f32[8,128], index: 3, kind: output, shape index: {}]
  %s4 = sld [smem:[#allocation0]]
  $region30: #{tpu_custom_call.1} parent=0
    _
  %s6 = ssub.s32 1, %s4
  %s7 = scalar_select 0, %s6, %s4
  $region1: #{tpu_custom_call.1} parent=0
    #allocation2 [shape = 'u8[4096]{0}', space=vmem, size = 0x1000, scoped, tag = 'input window, operand 0, single buffered']
    #allocation3 [shape = 's32[1]{0}', space=sflag, size = 0x4, scoped, tag = 'scoped memory for tpu_custom_call.1']
    #allocation4 [shape = 's32[1]{0}', space=sflag, size = 0x4, scoped, tag = 'scoped memory for tpu_custom_call.1']
    #allocation5 [shape = 'u8[65536]{0}', space=vmem, size = 0x10000, scoped, tag = 'input window, operand 1, single buffered']
    #allocation6 [shape = 's32[1]{0}', space=sflag, size = 0x4, scoped, tag = 'scoped memory for tpu_custom_call.1']
    #allocation7 [shape = 'u8[4096]{0}', space=vmem, size = 0x1000, scoped, tag = 'output window, operand 0, single buffered']
    %8 = vsyncpa [#allocation3], 0
    %9 = vsyncpa [#allocation6], 0
    %10 = vsyncpa [#allocation4], 0
    // Predicated region
    $region2: #{tpu_custom_call.1} parent=1 // pred_check
      _
    $region3: #{tpu_custom_call.1} parent=1 // pred_check_branch
      %12 = sbr.rel (0) target = $region5
    $region4: #{tpu_custom_call.1} parent=1 // pred_region
      %s14 = ssub.s32 128, 128
      %15 = vsyncadd [#allocation3], %s14
      %s17 = sshll.u32 [#allocation2], 4
      %s18 = int_to_ptr.vmem [resolvable:$true] %s17
      %20 = dma.hbm_to_vmem [thread:$0]  %s0, 128, %s18, [#allocation3]
    $region5: #{tpu_custom_call.1} parent=1 // pred_fallthru
      _
    // Predicated region
    $region6: #{tpu_custom_call.1} parent=1 // pred_check
      _
    $region7: #{tpu_custom_call.1} parent=1 // pred_check_branch
      %22 = sbr.rel (0) target = $region9
    $region8: #{tpu_custom_call.1} parent=1 // pred_region
      %s24 = ssub.s32 2048, 2048
      %25 = vsyncadd [#allocation6], %s24
      %s26 = sshll.u32 [#allocation5], 4
      %s27 = int_to_ptr.vmem [resolvable:$true] %s26
      %32 = dma.hbm_to_vmem [thread:$0]  %s1, 2048, %s27, [#allocation6], 128, 128, 8
    $region9: #{tpu_custom_call.1} parent=1 // pred_fallthru
      _
    // Predicated region
    $region10: #{tpu_custom_call.1} parent=1 // pred_check
      _
    $region11: #{tpu_custom_call.1} parent=1 // pred_check_branch
      %34 = sbr.rel (0) target = $region13
    $region12: #{tpu_custom_call.1} parent=1 // pred_region
      _
    $region13: #{tpu_custom_call.1} parent=1 // pred_fallthru
      _
    // Predicated region
    $region14: #{tpu_custom_call.1} parent=1 // pred_check
      _
    $region15: #{tpu_custom_call.1} parent=1 // pred_check_branch
      %36 = sbr.rel (0) target = $region17
    $region16: #{tpu_custom_call.1} parent=1 // pred_region
      %37 = dma.done [#allocation3], 128
    $region17: #{tpu_custom_call.1} parent=1 // pred_fallthru
      _
    // Predicated region
    $region18: #{tpu_custom_call.1} parent=1 // pred_check
      _
    $region19: #{tpu_custom_call.1} parent=1 // pred_check_branch
      %39 = sbr.rel (0) target = $region21
    $region20: #{tpu_custom_call.1} parent=1 // pred_region
      %40 = dma.done [#allocation6], 2048
    $region21: #{tpu_custom_call.1} parent=1 // pred_fallthru
      _
    %v41 = vld [vmem:[#allocation2] sm:$0xff]
    %v42 = vld [vmem:[#allocation5] sm:$0xff]
    %v43 = vld [vmem:[#allocation5 + $0x8] sm:$0xff]
    %v44 = vld [vmem:[#allocation5 + $0x10] sm:$0xff]
    %v45 = vld [vmem:[#allocation5 + $0x18] sm:$0xff]
    %v46 = vld [vmem:[#allocation5 + $0x20] sm:$0xff]
    %v47 = vld [vmem:[#allocation5 + $0x28] sm:$0xff]
    %v48 = vld [vmem:[#allocation5 + $0x30] sm:$0xff]
    %v49 = vld [vmem:[#allocation5 + $0x38] sm:$0xff]
    %v50 = vld [vmem:[#allocation5 + $0x40] sm:$0xff]
    %v51 = vld [vmem:[#allocation5 + $0x48] sm:$0xff]
    %v52 = vld [vmem:[#allocation5 + $0x50] sm:$0xff]
    %v53 = vld [vmem:[#allocation5 + $0x58] sm:$0xff]
    %v54 = vld [vmem:[#allocation5 + $0x60] sm:$0xff]
    %v55 = vld [vmem:[#allocation5 + $0x68] sm:$0xff]
    %v56 = vld [vmem:[#allocation5 + $0x70] sm:$0xff]
    %v57 = vld [vmem:[#allocation5 + $0x78] sm:$0xff]
    %v58 = vld [vmem:[%s2] sm:$0x1]
    %v60 = vlaneseq
    %v61 = vshrl.u32 %v60, 7
    %v62 = vsub.s32 0, %v61
    %v63 = vrot.slane %v58, %v62
    %65 = vmatprep.subr.mxu0 0.0
    %66 = vmatpush1.msra.mxu0 %v42
    %67 = vmatprep.subr.mxu0 0.0
    %68 = vmatpush1.msra.mxu0 %v43
    %69 = vmatprep.subr.mxu0 0.0
    %70 = vmatpush1.msra.mxu0 %v44
    %71 = vmatprep.subr.mxu0 0.0
    %72 = vmatpush1.msra.mxu0 %v45
    %73 = vmatprep.subr.mxu0 0.0
    %74 = vmatpush1.msra.mxu0 %v46
    %75 = vmatprep.subr.mxu0 0.0
    %76 = vmatpush1.msra.mxu0 %v47
    %77 = vmatprep.subr.mxu0 0.0
    %78 = vmatpush1.msra.mxu0 %v48
    %79 = vmatprep.subr.mxu0 0.0
    %80 = vmatpush1.msra.mxu0 %v49
    %81 = vmatprep.subr.mxu0 0.0
    %82 = vmatpush1.msra.mxu0 %v50
    %83 = vmatprep.subr.mxu0 0.0
    %84 = vmatpush1.msra.mxu0 %v51
    %85 = vmatprep.subr.mxu0 0.0
    %86 = vmatpush1.msra.mxu0 %v52
    %87 = vmatprep.subr.mxu0 0.0
    %88 = vmatpush1.msra.mxu0 %v53
    %89 = vmatprep.subr.mxu0 0.0
    %90 = vmatpush1.msra.mxu0 %v54
    %91 = vmatprep.subr.mxu0 0.0
    %92 = vmatpush1.msra.mxu0 %v55
    %93 = vmatprep.subr.mxu0 0.0
    %94 = vmatpush1.msra.mxu0 %v56
    %95 = vmatprep.subr.mxu0 0.0
    %96 = vmatpush1.msra.mxu0 %v57
    %97 = vmatprep.subr.mxu0 0.0
    %98 = vmatpush1.msra.mxu0 0.0
    %99 = vmatprep.subr.mxu0 0.0
    %100 = vmatpush1.msra.mxu0 0.0
    %101 = vmatprep.subr.mxu0 0.0
    %102 = vmatpush1.msra.mxu0 0.0
    %103 = vmatprep.subr.mxu0 0.0
    %104 = vmatpush1.msra.mxu0 0.0
    %105 = vmatprep.subr.mxu0 0.0
    %106 = vmatpush1.msra.mxu0 0.0
    %107 = vmatprep.subr.mxu0 0.0
    %108 = vmatpush1.msra.mxu0 0.0
    %109 = vmatprep.subr.mxu0 0.0
    %110 = vmatpush1.msra.mxu0 0.0
    %111 = vmatprep.subr.mxu0 0.0
    %112 = vmatpush1.msra.mxu0 0.0
    %113 = vmatprep.subr.mxu0 0.0
    %114 = vmatpush1.msra.mxu0 0.0
    %115 = vmatprep.subr.mxu0 0.0
    %116 = vmatpush1.msra.mxu0 0.0
    %117 = vmatprep.subr.mxu0 0.0
    %118 = vmatpush1.msra.mxu0 0.0
    %119 = vmatprep.subr.mxu0 0.0
    %120 = vmatpush1.msra.mxu0 0.0
    %121 = vmatprep.subr.mxu0 0.0
    %122 = vmatpush1.msra.mxu0 0.0
    %123 = vmatprep.subr.mxu0 0.0
    %124 = vmatpush1.msra.mxu0 0.0
    %125 = vmatprep.subr.mxu0 0.0
    %126 = vmatpush1.msra.mxu0 0.0
    %127 = vmatprep.subr.mxu0 0.0
    %128 = vmatpush1.msra.mxu0 0.0
    %129 = vmatprep.mubr.f32.mxu0 0.0
    %130 = vmatmul.mubr.f32.gmra.mrb[0].mxu0 %v41
    %v131 = vpop.f32.mrb[0].mxu0
    %v132 = vadd.f32 %v63, %v131
    %v133 = vpop.f32.mrb[0].mxu0
    %134 = vdwg.mxu0
    %135 = vst [vmem:[#allocation7] sm:$0xff] %v132
    // Predicated region
    $region22: #{tpu_custom_call.1} parent=1 // pred_check
      _
    $region23: #{tpu_custom_call.1} parent=1 // pred_check_branch
      %137 = sbr.rel (0) target = $region25
    $region24: #{tpu_custom_call.1} parent=1 // pred_region
      %s139 = ssub.s32 128, 128
      %140 = vsyncadd [#allocation4], %s139
      %s142 = sshll.u32 [#allocation7], 4
      %s143 = int_to_ptr.vmem [resolvable:$true] %s142
      %145 = dma.vmem_to_hbm [thread:$0]  %s143, 128, %s3, [#allocation4]
    $region25: #{tpu_custom_call.1} parent=1 // pred_fallthru
      _
    // Predicated region
    $region26: #{tpu_custom_call.1} parent=1 // pred_check
      _
    $region27: #{tpu_custom_call.1} parent=1 // pred_check_branch
      %147 = sbr.rel (0) target = $region29
    $region28: #{tpu_custom_call.1} parent=1 // pred_region
      %148 = dma.done [#allocation4], 128
    $region29: #{tpu_custom_call.1} parent=1 // pred_fallthru
      _
    %149 = vsyncpa [#allocation3], 1
    %150 = vsyncpa [#allocation6], 1
    %151 = vsyncpa [#allocation4], 1

</llo_original>
